<compile_context>
chip_gen: v7x
topology: tpu7x:2x2x1
jax: 0.10.0
libtpu: 0.0.40
codegen_flags: <defaults>
</compile_context>

<pallas_src>
import functools
import math

import jax
import jax.numpy as jnp
from jax.experimental import pallas as pl
from jax.experimental.pallas import tpu as pltpu


def _eca_kernel(x_ref, w_ref, b_ref, o_ref, *, cg, ksize):
    """One (tile_rows, HW) slab: lane-mean, channel conv, sigmoid, scale."""
    pad = (ksize - 1) // 2
    x = x_ref[...]                                    # (R, HW), input dtype
    xf = x.astype(jnp.float32)
    m = jnp.mean(xf, axis=-1, keepdims=True)          # (R, 1), f32 accumulate

    rows = m.shape[0]
    # Channel index within the group for every row.  tile_rows % cg == 0 and
    # every tile starts on a group boundary, so the block-local row index
    # modulo cg equals the global one.
    ch = jax.lax.broadcasted_iota(jnp.int32, (rows, 1), 0) % cg

    # conv1d(kernel=ksize, padding=pad) along the channel axis with zero
    # padding at every group boundary: y[i] = sum_k w[k] * m[i + k - pad].
    # Static sublane shifts go to the XLU, FMAs to the VPU.  Wrap-around from
    # the roll only touches rows whose (ch + d) is out of range, which the
    # validity mask zeroes.
    y = jnp.zeros_like(m)
    for k in range(ksize):
        d = k - pad
        shifted = m if d == 0 else jnp.roll(m, shift=-d, axis=0)
        valid = (ch + d >= 0) & (ch + d < cg)
        y = y + w_ref[k] * jnp.where(valid, shifted, 0.0)
    y = y + b_ref[0]

    s = jax.nn.sigmoid(y)                             # (R, 1) f32, EUP
    o_ref[...] = (xf * s).astype(o_ref.dtype)         # per-channel scaling


def _pick_tile_rows(total_rows, cg, hw, itemsize, vmem_bytes,
                    block_bytes_limit=None):
    """Largest row tile that is group-aligned, sublane-dense and fits VMEM."""
    # Sublane packing: 8 rows/f32, 16 rows/bf16, 32 rows/int8-fp8.
    sublanes = 8 * max(1, 4 // max(1, itemsize))
    unit = (cg * sublanes) // math.gcd(cg, sublanes)   # lcm(cg, sublanes)
    if total_rows % unit != 0:
        # Cannot tile with an aligned block -> single full-extent block.
        return total_rows
    # Double-buffered input + output blocks should stay <= ~1/4 of VMEM.
    budget = vmem_bytes // 16
    if block_bytes_limit is not None:
        budget = min(budget, block_bytes_limit)
    max_rows = max(budget // max(hw * itemsize, 1), 1)
    hi = min(total_rows, max(max_rows, unit))
    hi -= hi % unit
    t = hi
    while t >= unit:
        if total_rows % t == 0:
            return t
        t -= unit
    return unit


def channel_attention_eca(x, conv_w, conv_b, *, G=2, kernel_size=3,
                          block_bytes_limit=None):
    b, c, h, w = x.shape
    assert c % G == 0, "channels must be divisible by G"
    cg = c // G
    hw = h * w
    rows = b * c                      # == (b*G) * (c//G)

    # Sublane-dense streaming layout: rows = channels, lanes = spatial.
    x2d = x.reshape(rows, hw)
    conv_w = conv_w.reshape(kernel_size).astype(jnp.float32)
    conv_b = conv_b.reshape(1).astype(jnp.float32)

    # Generation-aware tile sizing (v7x has 64 MiB VMEM vs 128 MiB v5e/v6e).
    try:
        vmem_bytes = int(getattr(pltpu.get_tpu_info(), "vmem_capacity_bytes",
                                 64 * 1024 * 1024))
    except Exception:
        vmem_bytes = 64 * 1024 * 1024
    itemsize = x.dtype.itemsize
    tile_rows = _pick_tile_rows(rows, cg, hw, itemsize, vmem_bytes,
                                block_bytes_limit)
    grid = (rows // tile_rows,)

    kernel = functools.partial(_eca_kernel, cg=cg, ksize=kernel_size)

    flops = int(2 * rows * hw + 2 * rows * kernel_size)
    bytes_accessed = int(2 * rows * hw * itemsize + (kernel_size + 1) * 4)

    out2d = pl.pallas_call(
        kernel,
        out_shape=jax.ShapeDtypeStruct((rows, hw), x.dtype),
        grid=grid,
        in_specs=[
            pl.BlockSpec((tile_rows, hw), lambda i: (i, 0)),    # x slab (VMEM)
            pl.BlockSpec(memory_space=pltpu.MemorySpace.SMEM),  # conv weight (K,)
            pl.BlockSpec(memory_space=pltpu.MemorySpace.SMEM),  # conv bias (1,)
        ],
        out_specs=pl.BlockSpec((tile_rows, hw), lambda i: (i, 0)),
        compiler_params=pltpu.CompilerParams(
            dimension_semantics=("parallel",),
            vmem_limit_bytes=int(vmem_bytes // 2),
        ),
        cost_estimate=pl.CostEstimate(
            flops=flops, transcendentals=int(rows),
            bytes_accessed=bytes_accessed),
    )(x2d, conv_w, conv_b)
    return out2d.reshape(b, c, h, w)


def _reference(x, conv_w, conv_b, G, K):
    """Pure-JAX reference of the PyTorch forward."""
    b, c, h, w = x.shape
    cg = c // G
    xg = x.astype(jnp.float32).reshape(b * G, cg, h * w)
    m = jnp.mean(xg, axis=-1)
    pad = (K - 1) // 2
    mp = jnp.pad(m, ((0, 0), (pad, pad)))
    y = sum(conv_w[k] * mp[:, k:k + cg] for k in range(K)) + conv_b[0]
    s = jax.nn.sigmoid(y)
    return (xg * s[:, :, None]).reshape(b, c, h, w)


if __name__ == "__main__":
    key = jax.random.PRNGKey(0)
    kx, kw, kb, kx2 = jax.random.split(key, 4)

    # Shared, deterministic Conv1d(1, 1, K) parameters.
    K = 3
    conv_w = 0.5 * jax.random.normal(kw, (K,), dtype=jnp.float32)
    conv_b = 0.1 * jax.random.normal(kb, (1,), dtype=jnp.float32)

    # --- Test 1: f32, small shape matching the module's reference config. ---
    b, c, h, w = 2, 4, 16, 16
    G = 2
    x = jax.random.normal(kx, (b, c, h, w), dtype=jnp.float32)

    out = jax.block_until_ready(
        channel_attention_eca(x, conv_w, conv_b, G=G, kernel_size=K))
    ref = _reference(x, conv_w, conv_b, G, K)
    assert out.shape == x.shape and out.dtype == x.dtype
    assert jnp.allclose(out, ref, rtol=1e-5, atol=1e-5), \
        "Pallas kernel mismatch vs reference (f32)"

    # --- Test 2: bf16, with a small block budget to force a multi-step,    ---
    # --- double-buffered grid (exercises the tiled / pipelined path).      ---
    b2, c2, h2, w2 = 4, 16, 32, 32
    G2 = 4
    x2 = jax.random.normal(kx2, (b2, c2, h2, w2),
                           dtype=jnp.float32).astype(jnp.bfloat16)
    out2 = jax.block_until_ready(
        channel_attention_eca(x2, conv_w, conv_b, G=G2, kernel_size=K,
                              block_bytes_limit=64 * 1024))
    ref2 = _reference(x2, conv_w, conv_b, G2, K)
    assert out2.shape == x2.shape and out2.dtype == jnp.bfloat16
    assert jnp.allclose(out2.astype(jnp.float32), ref2, rtol=2e-2, atol=2e-2), \
        "Pallas kernel mismatch vs reference (bf16, tiled)"

    print("KERNEL_OK")
</pallas_src>

<mosaic_0001>
module attributes {stable_mosaic.version = 11 : i64} {
  func.func @_eca_kernel(%arg0: i32, %arg1: memref<8x256xf32, #tpu.memory_space<vmem>>, %arg2: memref<3xf32, #tpu.memory_space<smem>>, %arg3: memref<1xf32, #tpu.memory_space<smem>>, %arg4: memref<8x256xf32, #tpu.memory_space<vmem>>) attributes {dimension_semantics = [#tpu.dimension_semantics<parallel>], iteration_bounds = array<i64: 1>, scalar_prefetch = 0 : i64, scratch_operands = 0 : i64, tpu.core_type = #tpu.core_type<tc>, window_params = [{transform_indices = @transform_0, window_bounds = array<i64: 8, 256>}, {transform_indices = @transform_1, window_bounds = array<i64: 3>}, {transform_indices = @transform_2, window_bounds = array<i64: 1>}, {transform_indices = @transform_3, window_bounds = array<i64: 8, 256>}]} {
    %c0 = arith.constant 0 : index
    %c0_0 = arith.constant 0 : index
    %0 = vector.load %arg1[%c0, %c0_0] : memref<8x256xf32, #tpu.memory_space<vmem>>, vector<8x256xf32>
    %cst = arith.constant dense<0.000000e+00> : vector<8xf32>
    %1 = vector.multi_reduction <add>, %0, %cst [1] : vector<8x256xf32> to vector<8xf32>
    %2 = vector.shape_cast %1 : vector<8xf32> to vector<8x1xf32>
    %cst_1 = arith.constant 2.560000e+02 : f32
    %3 = vector.broadcast %cst_1 : f32 to vector<8x1xf32>
    %4 = arith.divf %2, %3 : vector<8x1xf32>
    %5 = tpu.iota {dimensions = array<i32: 0>} : vector<8x1xi32>
    %c2_i32 = arith.constant 2 : i32
    %c0_i32 = arith.constant 0 : i32
    %6 = arith.cmpi eq, %c2_i32, %c0_i32 : i32
    %c1_i32 = arith.constant 1 : i32
    %7 = arith.select %6, %c1_i32, %c2_i32 : i32
    %8 = vector.broadcast %7 : i32 to vector<8x1xi32>
    %9 = arith.remsi %5, %8 : vector<8x1xi32>
    %c0_i32_2 = arith.constant 0 : i32
    %10 = vector.broadcast %c0_i32_2 : i32 to vector<8x1xi32>
    %11 = arith.cmpi ne, %9, %10 : vector<8x1xi32>
    %c0_i32_3 = arith.constant 0 : i32
    %12 = vector.broadcast %c0_i32_3 : i32 to vector<8x1xi32>
    %13 = arith.cmpi slt, %9, %12 : vector<8x1xi32>
    %c0_i32_4 = arith.constant 0 : i32
    %14 = arith.cmpi slt, %7, %c0_i32_4 : i32
    %15 = vector.broadcast %14 : i1 to vector<8x1xi1>
    %16 = vector.broadcast %15 : vector<8x1xi1> to vector<8x1xi1>
    %17 = arith.xori %13, %16 : vector<8x1xi1>
    %18 = arith.andi %17, %11 : vector<8x1xi1>
    %19 = vector.broadcast %7 : i32 to vector<8x1xi32>
    %20 = arith.addi %9, %19 : vector<8x1xi32>
    %21 = arith.select %18, %20, %9 : vector<8x1xi1>, vector<8x1xi32>
    %cst_5 = arith.constant 0.000000e+00 : f32
    %22 = vector.broadcast %cst_5 : f32 to vector<8x1xf32>
    %23 = vector.extract_strided_slice %4 {offsets = [7, 0], sizes = [1, 1], strides = [1, 1]} : vector<8x1xf32> to vector<1x1xf32>
    %24 = vector.extract_strided_slice %4 {offsets = [0, 0], sizes = [7, 1], strides = [1, 1]} : vector<8x1xf32> to vector<7x1xf32>
    %25 = tpu.concatenate %23, %24 in 0 : vector<1x1xf32>, vector<7x1xf32> -> vector<8x1xf32>
    %c-1_i32 = arith.constant -1 : i32
    %26 = vector.broadcast %c-1_i32 : i32 to vector<8x1xi32>
    %27 = arith.addi %21, %26 : vector<8x1xi32>
    %c0_i32_6 = arith.constant 0 : i32
    %28 = vector.broadcast %c0_i32_6 : i32 to vector<8x1xi32>
    %29 = arith.cmpi sge, %27, %28 : vector<8x1xi32>
    %c-1_i32_7 = arith.constant -1 : i32
    %30 = vector.broadcast %c-1_i32_7 : i32 to vector<8x1xi32>
    %31 = arith.addi %21, %30 : vector<8x1xi32>
    %c2_i32_8 = arith.constant 2 : i32
    %32 = vector.broadcast %c2_i32_8 : i32 to vector<8x1xi32>
    %33 = arith.cmpi slt, %31, %32 : vector<8x1xi32>
    %34 = arith.andi %29, %33 : vector<8x1xi1>
    %c0_9 = arith.constant 0 : index
    %35 = memref.load %arg2[%c0_9] : memref<3xf32, #tpu.memory_space<smem>>
    %cst_10 = arith.constant 0.000000e+00 : f32
    %36 = vector.broadcast %cst_10 : f32 to vector<8x1xf32>
    %37 = arith.select %34, %25, %36 : vector<8x1xi1>, vector<8x1xf32>
    %38 = vector.broadcast %35 : f32 to vector<8x1xf32>
    %39 = arith.mulf %38, %37 : vector<8x1xf32>
    %40 = arith.addf %22, %39 : vector<8x1xf32>
    %c0_i32_11 = arith.constant 0 : i32
    %41 = vector.broadcast %c0_i32_11 : i32 to vector<8x1xi32>
    %42 = arith.addi %21, %41 : vector<8x1xi32>
    %c0_i32_12 = arith.constant 0 : i32
    %43 = vector.broadcast %c0_i32_12 : i32 to vector<8x1xi32>
    %44 = arith.cmpi sge, %42, %43 : vector<8x1xi32>
    %c0_i32_13 = arith.constant 0 : i32
    %45 = vector.broadcast %c0_i32_13 : i32 to vector<8x1xi32>
    %46 = arith.addi %21, %45 : vector<8x1xi32>
    %c2_i32_14 = arith.constant 2 : i32
    %47 = vector.broadcast %c2_i32_14 : i32 to vector<8x1xi32>
    %48 = arith.cmpi slt, %46, %47 : vector<8x1xi32>
    %49 = arith.andi %44, %48 : vector<8x1xi1>
    %c1 = arith.constant 1 : index
    %50 = memref.load %arg2[%c1] : memref<3xf32, #tpu.memory_space<smem>>
    %cst_15 = arith.constant 0.000000e+00 : f32
    %51 = vector.broadcast %cst_15 : f32 to vector<8x1xf32>
    %52 = arith.select %49, %4, %51 : vector<8x1xi1>, vector<8x1xf32>
    %53 = vector.broadcast %50 : f32 to vector<8x1xf32>
    %54 = arith.mulf %53, %52 : vector<8x1xf32>
    %55 = arith.addf %40, %54 : vector<8x1xf32>
    %56 = vector.extract_strided_slice %4 {offsets = [1, 0], sizes = [7, 1], strides = [1, 1]} : vector<8x1xf32> to vector<7x1xf32>
    %57 = vector.extract_strided_slice %4 {offsets = [0, 0], sizes = [1, 1], strides = [1, 1]} : vector<8x1xf32> to vector<1x1xf32>
    %58 = tpu.concatenate %56, %57 in 0 : vector<7x1xf32>, vector<1x1xf32> -> vector<8x1xf32>
    %c1_i32_16 = arith.constant 1 : i32
    %59 = vector.broadcast %c1_i32_16 : i32 to vector<8x1xi32>
    %60 = arith.addi %21, %59 : vector<8x1xi32>
    %c0_i32_17 = arith.constant 0 : i32
    %61 = vector.broadcast %c0_i32_17 : i32 to vector<8x1xi32>
    %62 = arith.cmpi sge, %60, %61 : vector<8x1xi32>
    %c1_i32_18 = arith.constant 1 : i32
    %63 = vector.broadcast %c1_i32_18 : i32 to vector<8x1xi32>
    %64 = arith.addi %21, %63 : vector<8x1xi32>
    %c2_i32_19 = arith.constant 2 : i32
    %65 = vector.broadcast %c2_i32_19 : i32 to vector<8x1xi32>
    %66 = arith.cmpi slt, %64, %65 : vector<8x1xi32>
    %67 = arith.andi %62, %66 : vector<8x1xi1>
    %c2 = arith.constant 2 : index
    %68 = memref.load %arg2[%c2] : memref<3xf32, #tpu.memory_space<smem>>
    %cst_20 = arith.constant 0.000000e+00 : f32
    %69 = vector.broadcast %cst_20 : f32 to vector<8x1xf32>
    %70 = arith.select %67, %58, %69 : vector<8x1xi1>, vector<8x1xf32>
    %71 = vector.broadcast %68 : f32 to vector<8x1xf32>
    %72 = arith.mulf %71, %70 : vector<8x1xf32>
    %73 = arith.addf %55, %72 : vector<8x1xf32>
    %c0_21 = arith.constant 0 : index
    %74 = memref.load %arg3[%c0_21] : memref<1xf32, #tpu.memory_space<smem>>
    %75 = vector.broadcast %74 : f32 to vector<8x1xf32>
    %76 = arith.addf %73, %75 : vector<8x1xf32>
    %77 = arith.negf %76 : vector<8x1xf32>
    %78 = math.exp %77 : vector<8x1xf32>
    %cst_22 = arith.constant 1.000000e+00 : f32
    %79 = vector.broadcast %cst_22 : f32 to vector<8x1xf32>
    %80 = arith.addf %79, %78 : vector<8x1xf32>
    %81 = arith.divf %79, %80 : vector<8x1xf32>
    %82 = vector.broadcast %81 : vector<8x1xf32> to vector<8x256xf32>
    %83 = arith.mulf %0, %82 : vector<8x256xf32>
    %c0_23 = arith.constant 0 : index
    %c0_24 = arith.constant 0 : index
    %84 = vector.load %arg4[%c0_23, %c0_24] : memref<8x256xf32, #tpu.memory_space<vmem>>, vector<8x256xf32>
    tpu.vector_store %arg4[%c0_23, %c0_24], %83 {strides = array<i32>} : memref<8x256xf32, #tpu.memory_space<vmem>>, vector<8x256xf32>,
    return
  }
  func.func @transform_0(%arg0: i32) -> (i32, i32) {
    %c0_i32 = arith.constant 0 : i32
    %c0_i32_0 = arith.constant 0 : i32
    return %arg0, %c0_i32 : i32, i32
  }
  func.func @transform_1(%arg0: i32) -> i32 {
    %c0_i32 = arith.constant 0 : i32
    %c0_i32_0 = arith.constant 0 : i32
    return %c0_i32 : i32
  }
  func.func @transform_2(%arg0: i32) -> i32 {
    %c0_i32 = arith.constant 0 : i32
    %c0_i32_0 = arith.constant 0 : i32
    return %c0_i32 : i32
  }
  func.func @transform_3(%arg0: i32) -> (i32, i32) {
    %c0_i32 = arith.constant 0 : i32
    %c0_i32_0 = arith.constant 0 : i32
    return %arg0, %c0_i32 : i32, i32
  }
}

</mosaic_0001>

<llo_original>
// kernel: tpu_custom_call.1
$region0: #{tpu_custom_call.1}
  #allocation0 [shape = 'u32[]', space=smem, size = 0x4, offset = 0x4, fixed_abs, tag = 'smem constant byte address 0x4 - core index']
  #allocation1 [shape = 'u32[144,128]{1,0:T(1,128)}', space=vmem, size = 0x12000, scoped, tag = 'internal scratch']
  #allocation2 [shape = 'f32[1]{0:T(128)S(6)}', space=smem, size = 0x200, scoped, tag = 'scoped memory for tpu_custom_call.1']
  %s0 = inlined_call_operand.hbm [shape: f32[8,256], index: 0, kind: input, shape index: {}]
  %s1 = inlined_call_operand.vmem [shape: f32[3], index: 1, kind: input, shape index: {}]
  %s2 = inlined_call_operand.<no memory space> [shape: f32[1], index: 2, kind: input, shape index: {}]
  %s3 = inlined_call_operand.hbm [shape: f32[8,256], index: 3, kind: output, shape index: {}]
  %s4 = sld [smem:[#allocation0]]
  $region30: #{tpu_custom_call.1} parent=0
    _
  %s6 = ssub.s32 1, %s4
  %s7 = scalar_select 0, %s6, %s4
  %8 = sst [smem:[#allocation2]] %s2
  $region1: #{tpu_custom_call.1} parent=0
    #allocation3 [shape = 'u8[8192]{0}', space=vmem, size = 0x2000, scoped, tag = 'input window, operand 0, single buffered']
    #allocation4 [shape = 's32[1]{0}', space=sflag, size = 0x4, scoped, tag = 'scoped memory for tpu_custom_call.1']
    #allocation5 [shape = 's32[1]{0}', space=sflag, size = 0x4, scoped, tag = 'scoped memory for tpu_custom_call.1']
    #allocation6 [shape = 's32[1]{0}', space=sflag, size = 0x4, scoped, tag = 'scoped memory for tpu_custom_call.1']
    #allocation7 [shape = 'u8[512]{0}', space=smem, size = 0x200, scoped, tag = 'input window, operand 1, single buffered']
    #allocation8 [shape = 'u8[8192]{0}', space=vmem, size = 0x2000, scoped, tag = 'output window, operand 0, single buffered']
    %9 = vsyncpa [#allocation4], 0
    %10 = vsyncpa [#allocation6], 0
    %11 = vsyncpa [#allocation5], 0
    // Predicated region
    $region2: #{tpu_custom_call.1} parent=1 // pred_check
      _
    $region3: #{tpu_custom_call.1} parent=1 // pred_check_branch
      %13 = sbr.rel (0) target = $region5
    $region4: #{tpu_custom_call.1} parent=1 // pred_region
      %s15 = ssub.s32 256, 256
      %16 = vsyncadd [#allocation4], %s15
      %s18 = sshll.u32 [#allocation3], 4
      %s19 = int_to_ptr.vmem [resolvable:$true] %s18
      %21 = dma.hbm_to_vmem [thread:$0]  %s0, 256, %s19, [#allocation4]
    $region5: #{tpu_custom_call.1} parent=1 // pred_fallthru
      _
    // Predicated region
    $region6: #{tpu_custom_call.1} parent=1 // pred_check
      _
    $region7: #{tpu_custom_call.1} parent=1 // pred_check_branch
      %23 = sbr.rel (0) target = $region9
    $region8: #{tpu_custom_call.1} parent=1 // pred_region
      %s25 = ssub.s32 16, 16
      %26 = vsyncadd [#allocation6], %s25
      %s28 = sshll.u32 %s1, 4
      %s29 = int_to_ptr.vmem [resolvable:$true] %s28
      %31 = dma.vmem_to_smem %s29, 16, [#allocation7], [#allocation6]
    $region9: #{tpu_custom_call.1} parent=1 // pred_fallthru
      _
    // Predicated region
    $region10: #{tpu_custom_call.1} parent=1 // pred_check
      _
    $region11: #{tpu_custom_call.1} parent=1 // pred_check_branch
      %33 = sbr.rel (0) target = $region13
    $region12: #{tpu_custom_call.1} parent=1 // pred_region
      _
    $region13: #{tpu_custom_call.1} parent=1 // pred_fallthru
      _
    // Predicated region
    $region14: #{tpu_custom_call.1} parent=1 // pred_check
      _
    $region15: #{tpu_custom_call.1} parent=1 // pred_check_branch
      %35 = sbr.rel (0) target = $region17
    $region16: #{tpu_custom_call.1} parent=1 // pred_region
      %36 = dma.done [#allocation4], 256
    $region17: #{tpu_custom_call.1} parent=1 // pred_fallthru
      _
    // Predicated region
    $region18: #{tpu_custom_call.1} parent=1 // pred_check
      _
    $region19: #{tpu_custom_call.1} parent=1 // pred_check_branch
      %38 = sbr.rel (0) target = $region21
    $region20: #{tpu_custom_call.1} parent=1 // pred_region
      %39 = dma.done [#allocation6], 16
    $region21: #{tpu_custom_call.1} parent=1 // pred_fallthru
      _
    %40 = sfence
    %v41 = vld [vmem:[#allocation3] sm:$0xff]
    %v42 = vld [vmem:[#allocation3 + $0x8] sm:$0xff]
    %v43 = vadd.f32 %v41, %v42
    %44 = vadd.xlane.f32.xlu0 %v43
    %v45 = vpop.xlane.xlu0 %44
    %v46 = vrcp.pop 256.0
    %v47 = vmul.f32 %v45, %v46
    %v48 = vlaneseq
    %v49 = vshrl.u32 %v48, 7
    %vm50 = vcmp.lt.s32.totalorder %v49, 0
    %v51 = vsub.s32 0, %v49
    %v52 = vsel %vm50, %v51, %v49
    %v53 = vshrl.u32 %v52, 1
    %v54 = vand.u32 %v52, 1
    %v55 = vsub.s32 0, %v54
    %v56 = vsel %vm50, %v55, %v54
    %vm57 = vcmp.ne.s32.totalorder %v56, 0
    %vm58 = vcmp.lt.s32.totalorder %v56, 0
    %vm59 = vmand %vm58, %vm57
    %v60 = vadd.s32 %v56, 2
    %v61 = vsel %vm59, %v60, %v56
    %v63 = vrot.slane %v47, 7
    %vm65 = vcmask 1040384
    %v66 = vsel %vm65, %v63, %v63
    %v67 = vadd.s32 %v61, 4294967295
    %vm68 = vcmp.ge.s32.totalorder %v67, 0
    %vm69 = vcmp.lt.s32.totalorder %v67, 2
    %vm70 = vmand %vm68, %vm69
    %s71 = sld [smem:[#allocation7]]
    %v72 = vsel %vm70, %v66, 0.0
    %v73 = vstv %s71
    %v74 = vmul.f32 %v73, %v72
    %v75 = vadd.f32 %v74, 0.0
    %vm76 = vcmp.ge.s32.totalorder %v61, 0
    %vm77 = vcmp.lt.s32.totalorder %v61, 2
    %vm78 = vmand %vm76, %vm77
    %s79 = sld [smem:[#allocation7 + $0x1]]
    %v80 = vsel %vm78, %v47, 0.0
    %v81 = vstv %s79
    %v82 = vmul.f32 %v81, %v80
    %v83 = vadd.f32 %v75, %v82
    %v84 = vrot.slane %v47, 1
    %vm86 = vcmask 1046528
    %v87 = vsel %vm86, %v84, %v84
    %v88 = vadd.s32 %v61, 1
    %vm89 = vcmp.ge.s32.totalorder %v88, 0
    %vm90 = vcmp.lt.s32.totalorder %v88, 2
    %vm91 = vmand %vm89, %vm90
    %s92 = sld [smem:[#allocation7 + $0x2]]
    %v93 = vsel %vm91, %v87, 0.0
    %v94 = vstv %s92
    %v95 = vmul.f32 %v94, %v93
    %v96 = vadd.f32 %v83, %v95
    %s97 = sld [smem:[#allocation2]]
    %v98 = vstv %s97
    %v99 = vadd.f32 %v96, %v98
    %v100 = vxor.u32 %v99, 2147483648
    %v101 = vmul.f32 %v100, 1.442695
    %v102 = vpow.pop %v101
    %v103 = vadd.f32 %v102, 1.0
    %v104 = vrcp.pop %v103
    %v105 = vmul.f32 1.0, %v104
    %107 = vset.pattern.permute.xlu0 0
    %108 = vperm.xlu0 %107, %v105
    %v109 = vpop.permute.xlu0 %108
    %v111 = vmul.f32 %v41, %v109
    %v112 = vmul.f32 %v42, %v109
    %113 = vst [vmem:[#allocation8] sm:$0xff] %v111
    %114 = vst [vmem:[#allocation8 + $0x8] sm:$0xff] %v112
    // Predicated region
    $region22: #{tpu_custom_call.1} parent=1 // pred_check
      _
    $region23: #{tpu_custom_call.1} parent=1 // pred_check_branch
      %116 = sbr.rel (0) target = $region25
    $region24: #{tpu_custom_call.1} parent=1 // pred_region
      %s118 = ssub.s32 256, 256
      %119 = vsyncadd [#allocation5], %s118
      %s121 = sshll.u32 [#allocation8], 4
      %s122 = int_to_ptr.vmem [resolvable:$true] %s121
      %124 = dma.vmem_to_hbm [thread:$0]  %s122, 256, %s3, [#allocation5]
    $region25: #{tpu_custom_call.1} parent=1 // pred_fallthru
      _
    // Predicated region
    $region26: #{tpu_custom_call.1} parent=1 // pred_check
      _
    $region27: #{tpu_custom_call.1} parent=1 // pred_check_branch
      %126 = sbr.rel (0) target = $region29
    $region28: #{tpu_custom_call.1} parent=1 // pred_region
      %127 = dma.done [#allocation5], 256
    $region29: #{tpu_custom_call.1} parent=1 // pred_fallthru
      _
    %128 = vsyncpa [#allocation4], 1
    %129 = vsyncpa [#allocation5], 1
    %130 = vsyncpa [#allocation6], 1

</llo_original>
